<compile_context>
chip_gen: v7x
topology: tpu7x:2x2x1
jax: 0.10.0
libtpu: 0.0.40
codegen_flags: <defaults>
</compile_context>

<pallas_src>
import functools

import jax
import jax.numpy as jnp
from jax import lax
from jax.experimental import pallas as pl
from jax.experimental.pallas import tpu as pltpu


# ----------------------------- generation-aware budgets -----------------------------

def _vmem_capacity_bytes():
    """Physical VMEM per TensorCore; falls back to the v7x (smallest) figure."""
    try:
        info = pltpu.get_tpu_info()
        for attr in ("vmem_capacity_bytes", "vmem_size_bytes", "vmem_bytes"):
            v = getattr(info, attr, None)
            if v:
                return int(v)
    except Exception:
        pass
    return 64 * 1024 * 1024


_VMEM_CAP = _vmem_capacity_bytes()
# ~96 MiB on v5e/v6e (128 MiB physical), ~48 MiB on v7x (64 MiB physical).
_VMEM_LIMIT = min(int(_VMEM_CAP) * 3 // 4, 100 * 1024 * 1024)
# Fused path keeps one whole image resident: ~2x(4+4+1) B/elem of pipeline
# buffers + ~20-24 B/elem of in-kernel f32 casts/temps  =>  budget ~48 B/elem.
_FUSED_MAX_ELEMS = _VMEM_LIMIT // 48
# Streamed row-slab: 3 inputs x 2 pipeline buffers + f32 temps  =>  ~56 B/elem.
_TILE_TARGET_ELEMS = _VMEM_LIMIT // 56


# --------------------------------------- kernels ------------------------------------

def _fused_kernel(p_ref, t_ref, m_ref, out_ref):
    """One whole image resident in VMEM: 5 masked sums -> 2x2 solve -> masked L1.

    Grid axis is the batch ("parallel"); refs are (1, H, W). The output row packs
    [abs_err_sum, mask_count, 0, ...] for this image. Each array is read from HBM
    exactly once.
    """
    p = p_ref[...].astype(jnp.float32)
    t = t_ref[...].astype(jnp.float32)
    m = m_ref[...].astype(jnp.float32)

    mp = m * p
    a00 = jnp.sum(mp * p)
    a01 = jnp.sum(mp)
    a11 = jnp.sum(m)
    b0 = jnp.sum(mp * t)
    b1 = jnp.sum(m * t)

    det = a00 * a11 - a01 * a01
    valid = det > 0.0
    safe = jnp.where(valid, det, 1.0)
    scale = jnp.where(valid, (a11 * b0 - a01 * b1) / safe, 0.0)
    shift = jnp.where(valid, (a00 * b1 - a01 * b0) / safe, 0.0)

    abs_sum = jnp.sum(m * jnp.abs(scale * p + shift - t))

    lane = lax.broadcasted_iota(jnp.int32, (1, 8), 1)
    out_ref[...] = jnp.where(lane == 0, abs_sum, jnp.where(lane == 1, a11, 0.0))


def _sums_tiled_kernel(p_ref, t_ref, m_ref, out_ref, *, th, h, nb):
    """Packed per-slab partial sums [a00, a01, a11, b0, b1, 0, 0, 0].

    Full slabs take an unmasked fast path; only the statically-known ragged last
    slab pays the (th, 1) row-mask selects (broadcast over lanes).
    """
    lane = lax.broadcasted_iota(jnp.int32, (1, 8), 1)

    def emit(p, t, m):
        mp = m * p
        a00 = jnp.sum(mp * p)
        a01 = jnp.sum(mp)
        a11 = jnp.sum(m)
        b0 = jnp.sum(mp * t)
        b1 = jnp.sum(m * t)
        out_ref[...] = jnp.where(
            lane == 0, a00,
            jnp.where(lane == 1, a01,
                      jnp.where(lane == 2, a11,
                                jnp.where(lane == 3, b0,
                                          jnp.where(lane == 4, b1, 0.0)))))

    rem = h % th                                    # static Python int
    if rem == 0:
        emit(p_ref[...].astype(jnp.float32),
             t_ref[...].astype(jnp.float32),
             m_ref[...].astype(jnp.float32))
    else:
        j = pl.program_id(0)

        @pl.when(j < nb - 1)
        def _():
            emit(p_ref[...].astype(jnp.float32),
                 t_ref[...].astype(jnp.float32),
                 m_ref[...].astype(jnp.float32))

        @pl.when(j == nb - 1)
        def _():
            keep = lax.broadcasted_iota(jnp.int32, (th, 1), 0) < rem
            # Keep the selects on p/t too: OOB rows of the padded last block are
            # unspecified and could be Inf/NaN (0 * Inf = NaN otherwise).
            emit(jnp.where(keep, p_ref[...].astype(jnp.float32), 0.0),
                 jnp.where(keep, t_ref[...].astype(jnp.float32), 0.0),
                 jnp.where(keep, m_ref[...].astype(jnp.float32), 0.0))


def _abs_tiled_kernel(sums_ref, p_ref, t_ref, m_ref, out_ref, *, th, h, nb):
    """Masked L1 partial sum per slab.

    The (nb, 8) pass-1 partials are reduced and the 2x2 solve is done in-kernel
    (tiny, lane-sliced, no scalar extraction), removing the host-side glue and the
    float scalar-prefetch between the two passes.
    """
    red = jnp.sum(sums_ref[...], axis=0, keepdims=True)     # (1, 8)
    a00 = red[:, 0:1]
    a01 = red[:, 1:2]
    a11 = red[:, 2:3]
    b0 = red[:, 3:4]
    b1 = red[:, 4:5]
    det = a00 * a11 - a01 * a01
    valid = det > 0.0
    safe = jnp.where(valid, det, 1.0)
    scale = jnp.where(valid, (a11 * b0 - a01 * b1) / safe, 0.0)   # (1, 1)
    shift = jnp.where(valid, (a00 * b1 - a01 * b0) / safe, 0.0)   # (1, 1)

    lane = lax.broadcasted_iota(jnp.int32, (1, 8), 1)

    def emit(p, t, m):
        err = jnp.sum(m * jnp.abs(scale * p + shift - t))
        out_ref[...] = jnp.where(lane == 0, err, 0.0)

    rem = h % th                                    # static Python int
    if rem == 0:
        emit(p_ref[...].astype(jnp.float32),
             t_ref[...].astype(jnp.float32),
             m_ref[...].astype(jnp.float32))
    else:
        j = pl.program_id(0)

        @pl.when(j < nb - 1)
        def _():
            emit(p_ref[...].astype(jnp.float32),
                 t_ref[...].astype(jnp.float32),
                 m_ref[...].astype(jnp.float32))

        @pl.when(j == nb - 1)
        def _():
            keep = lax.broadcasted_iota(jnp.int32, (th, 1), 0) < rem
            emit(jnp.where(keep, p_ref[...].astype(jnp.float32), 0.0),
                 jnp.where(keep, t_ref[...].astype(jnp.float32), 0.0),
                 jnp.where(keep, m_ref[...].astype(jnp.float32), 0.0))


# ----------------------------------- driver helpers ----------------------------------

def _ssi_fused_batched(pred, targ, msk):
    """Single launch over the whole batch; returns (sum |err|, sum mask count)."""
    B, h, w = pred.shape
    out = pl.pallas_call(
        _fused_kernel,
        out_shape=jax.ShapeDtypeStruct((B, 8), jnp.float32),
        grid_spec=pltpu.PrefetchScalarGridSpec(
            num_scalar_prefetch=0,
            grid=(B,),
            in_specs=[pl.BlockSpec((1, h, w), lambda b: (b, 0, 0))] * 3,
            out_specs=pl.BlockSpec((1, 8), lambda b: (b, 0)),
        ),
        compiler_params=pltpu.CompilerParams(
            dimension_semantics=("parallel",),
            vmem_limit_bytes=_VMEM_LIMIT),
    )(pred, targ, msk)
    return jnp.sum(out[:, 0]), jnp.sum(out[:, 1])


def _ssi_single_tiled(pred, targ, msk, tile_rows):
    """Streaming two-pass path for one large image; returns (|err| sum, count)."""
    h, w = pred.shape
    if tile_rows is not None:
        th = int(tile_rows)
    else:
        th = (_TILE_TARGET_ELEMS // max(w, 1)) // 32 * 32
    if th <= 0 or th >= h:
        th = h                                   # single slab; block == full dims
    else:
        th = max(32, (th // 32) * 32)            # 1-byte (bool/int8) sublane tiling
    nb = pl.cdiv(h, th)

    cparams = pltpu.CompilerParams(
        dimension_semantics=("parallel",),       # slabs independent -> v7x 2-TC split
        vmem_limit_bytes=_VMEM_LIMIT)
    data_spec = pl.BlockSpec((th, w), lambda j: (j, 0))
    row_spec = pl.BlockSpec((1, 8), lambda j: (j, 0))
    partial_shape = jax.ShapeDtypeStruct((nb, 8), jnp.float32)

    # pass 1: per-slab packed partial sums [a00, a01, a11, b0, b1, 0, 0, 0]
    sums = pl.pallas_call(
        functools.partial(_sums_tiled_kernel, th=th, h=h, nb=nb),
        out_shape=partial_shape,
        grid_spec=pltpu.PrefetchScalarGridSpec(
            num_scalar_prefetch=0, grid=(nb,),
            in_specs=[data_spec] * 3, out_specs=row_spec),
        compiler_params=cparams,
    )(pred, targ, msk)

    # pass 2: masked L1 partial sums; the 2x2 solve happens inside the kernel from
    # the (nb, 8) partials (no scalar-prefetch, no host-side scalar glue).
    sums_spec = pl.BlockSpec((nb, 8), lambda j: (0, 0))
    errs = pl.pallas_call(
        functools.partial(_abs_tiled_kernel, th=th, h=h, nb=nb),
        out_shape=partial_shape,
        grid_spec=pltpu.PrefetchScalarGridSpec(
            num_scalar_prefetch=0, grid=(nb,),
            in_specs=[sums_spec] + [data_spec] * 3, out_specs=row_spec),
        compiler_params=cparams,
    )(sums, pred, targ, msk)

    return jnp.sum(errs[:, 0]), jnp.sum(sums[:, 2])


# ---------------------------------------- wrapper -------------------------------------

@functools.partial(jax.jit,
                   static_argnames=("interpolate", "_force_tiled", "_tile_rows"))
def ssi_loss(prediction, target, mask, interpolate=True,
             _force_tiled=False, _tile_rows=None):
    if prediction.shape[-1] != target.shape[-1] and interpolate:
        # TODO(synk): bilinear resize (align_corners=True) of the prediction to the
        # target spatial size is not implemented in the Pallas port.
        raise NotImplementedError("bilinear align_corners=True resize branch")

    pred = jnp.squeeze(prediction)       # mimic torch .squeeze()
    targ = jnp.squeeze(target)
    msk = jnp.squeeze(mask)
    assert pred.shape == targ.shape, f"Shape mismatch: {pred.shape} vs {targ.shape}"
    assert msk.shape == pred.shape, f"Mask shape mismatch: {msk.shape} vs {pred.shape}"

    if pred.ndim == 2:                   # canonical case after squeeze: single image
        pred, targ, msk = pred[None], targ[None], msk[None]
    assert pred.ndim == 3, f"Unsupported rank after squeeze: {pred.shape}"

    # Mask streams at its native 1 B/elem (bool or int8) — cast to f32 in-kernel.
    B, h, w = pred.shape
    n = h * w

    if n <= _FUSED_MAX_ELEMS and not _force_tiled:
        abs_total, cnt_total = _ssi_fused_batched(pred, targ, msk)
    else:
        abs_total = jnp.float32(0.0)
        cnt_total = jnp.float32(0.0)
        for b in range(B):               # canonical (squeezed) case is B == 1
            a, c = _ssi_single_tiled(pred[b], targ[b], msk[b], _tile_rows)
            abs_total = abs_total + a
            cnt_total = cnt_total + c

    # F.l1_loss(scaled_pred[mask], target[mask]) == global masked mean.
    # (All-zero mask yields NaN, matching the PyTorch reference.)
    return abs_total / cnt_total


# ------------------------------------ pure-JAX reference --------------------------------

def ssi_loss_ref(prediction, target, mask):
    pred = jnp.squeeze(prediction).astype(jnp.float32)
    targ = jnp.squeeze(target).astype(jnp.float32)
    m = jnp.squeeze(mask).astype(jnp.float32)
    if pred.ndim == 2:
        pred, targ, m = pred[None], targ[None], m[None]
    a00 = jnp.sum(m * pred * pred, (1, 2))
    a01 = jnp.sum(m * pred, (1, 2))
    a11 = jnp.sum(m, (1, 2))
    b0 = jnp.sum(m * pred * targ, (1, 2))
    b1 = jnp.sum(m * targ, (1, 2))
    det = a00 * a11 - a01 * a01
    valid = det > 0
    sd = jnp.where(valid, det, 1.0)
    scale = jnp.where(valid, (a11 * b0 - a01 * b1) / sd, 0.0)
    shift = jnp.where(valid, (-a01 * b0 + a00 * b1) / sd, 0.0)
    scaled = scale[:, None, None] * pred + shift[:, None, None]
    return jnp.sum(m * jnp.abs(scaled - targ)) / jnp.sum(m)


# --------------------------------------------- main ---------------------------------------

if __name__ == "__main__":
    key = jax.random.PRNGKey(0)

    def make(shape, k):
        k1, k2, k3 = jax.random.split(k, 3)
        p = jax.random.normal(k1, shape, dtype=jnp.float32) + 2.0
        t = jax.random.normal(k2, shape, dtype=jnp.float32) * 0.5 + 3.0
        m = jax.random.uniform(k3, shape) > 0.3        # boolean mask, streamed as-is
        return p, t, m

    k1, k2, k3, k4 = jax.random.split(key, 4)

    # 1) canonical NCHW, batch=1 -> batched fused single-pass VMEM-resident path.
    p, t, m = make((1, 1, 16, 16), k1)
    loss = ssi_loss(p, t, m)
    jax.block_until_ready(loss)
    ref = ssi_loss_ref(p, t, m)
    assert jnp.isfinite(loss), loss
    assert jnp.allclose(loss, ref, rtol=1e-3, atol=1e-4), (loss, ref)

    # 2) streaming two-pass path with a ragged last slab (80 rows, slab height 64):
    #    exercises the unmasked fast slab, the masked last slab, and the in-kernel solve.
    p, t, m = make((1, 1, 80, 256), k2)
    loss = ssi_loss(p, t, m, _force_tiled=True, _tile_rows=64)
    jax.block_until_ready(loss)
    ref = ssi_loss_ref(p, t, m)
    assert jnp.isfinite(loss), loss
    assert jnp.allclose(loss, ref, rtol=1e-3, atol=1e-4), (loss, ref)

    # 3) bf16 pred/target stream at half the HBM bytes; accumulation stays f32.
    p, t, m = make((1, 1, 64, 128), k3)
    p, t = p.astype(jnp.bfloat16), t.astype(jnp.bfloat16)
    loss = ssi_loss(p, t, m)
    jax.block_until_ready(loss)
    ref = ssi_loss_ref(p, t, m)
    assert jnp.isfinite(loss), loss
    assert jnp.allclose(loss, ref, rtol=1e-3, atol=1e-4), (loss, ref)

    # 4) batch=2 -> one launch, "parallel" batch grid (per-image scale/shift,
    #    global masked mean), matching torch's squeezed-batch behavior.
    p, t, m = make((2, 1, 24, 32), k4)
    loss = ssi_loss(p, t, m)
    jax.block_until_ready(loss)
    ref = ssi_loss_ref(p, t, m)
    assert jnp.isfinite(loss), loss
    assert jnp.allclose(loss, ref, rtol=1e-3, atol=1e-4), (loss, ref)

    print("KERNEL_OK")
</pallas_src>

<mosaic_0001>
module attributes {stable_mosaic.version = 11 : i64} {
  func.func @_fused_kernel(%arg0: i32, %arg1: memref<1x16x16xf32, #tpu.memory_space<vmem>>, %arg2: memref<1x16x16xf32, #tpu.memory_space<vmem>>, %arg3: memref<1x16x16xi32, #tpu.memory_space<vmem>>, %arg4: memref<1x8xf32, #tpu.memory_space<vmem>>) attributes {dimension_semantics = [#tpu.dimension_semantics<parallel>], iteration_bounds = array<i64: 1>, scalar_prefetch = 0 : i64, scratch_operands = 0 : i64, tpu.core_type = #tpu.core_type<tc>, window_params = [{transform_indices = @transform_0, window_bounds = array<i64: 1, 16, 16>}, {transform_indices = @transform_1, window_bounds = array<i64: 1, 16, 16>}, {transform_indices = @transform_2, window_bounds = array<i64: 1, 16, 16>}, {transform_indices = @transform_3, window_bounds = array<i64: 1, 8>}]} {
    %c0 = arith.constant 0 : index
    %c0_0 = arith.constant 0 : index
    %c0_1 = arith.constant 0 : index
    %0 = vector.load %arg1[%c0, %c0_0, %c0_1] : memref<1x16x16xf32, #tpu.memory_space<vmem>>, vector<1x16x16xf32>
    %c0_2 = arith.constant 0 : index
    %c0_3 = arith.constant 0 : index
    %c0_4 = arith.constant 0 : index
    %1 = vector.load %arg2[%c0_2, %c0_3, %c0_4] : memref<1x16x16xf32, #tpu.memory_space<vmem>>, vector<1x16x16xf32>
    %c0_5 = arith.constant 0 : index
    %c0_6 = arith.constant 0 : index
    %c0_7 = arith.constant 0 : index
    %2 = vector.load %arg3[%c0_5, %c0_6, %c0_7] : memref<1x16x16xi32, #tpu.memory_space<vmem>>, vector<1x16x16xi32>
    %cst = arith.constant dense<0> : vector<1x16x16xi32>
    %3 = arith.cmpi ne, %2, %cst : vector<1x16x16xi32>
    %4 = arith.extui %3 : vector<1x16x16xi1> to vector<1x16x16xi32>
    %5 = arith.sitofp %4 : vector<1x16x16xi32> to vector<1x16x16xf32>
    %6 = arith.mulf %5, %0 : vector<1x16x16xf32>
    %7 = arith.mulf %6, %0 : vector<1x16x16xf32>
    %8 = vector.shape_cast %7 : vector<1x16x16xf32> to vector<1x1x16x16xf32>
    %cst_8 = arith.constant dense<0.000000e+00> : vector<1xf32>
    %9 = vector.multi_reduction <add>, %8, %cst_8 [1, 2, 3] : vector<1x1x16x16xf32> to vector<1xf32>
    %10 = vector.shape_cast %9 : vector<1xf32> to vector<1x1x1x1xf32>
    %11 = vector.extract %10[0, 0, 0, 0] : f32 from vector<1x1x1x1xf32>
    %12 = vector.shape_cast %6 : vector<1x16x16xf32> to vector<1x1x16x16xf32>
    %cst_9 = arith.constant dense<0.000000e+00> : vector<1xf32>
    %13 = vector.multi_reduction <add>, %12, %cst_9 [1, 2, 3] : vector<1x1x16x16xf32> to vector<1xf32>
    %14 = vector.shape_cast %13 : vector<1xf32> to vector<1x1x1x1xf32>
    %15 = vector.extract %14[0, 0, 0, 0] : f32 from vector<1x1x1x1xf32>
    %16 = vector.shape_cast %5 : vector<1x16x16xf32> to vector<1x1x16x16xf32>
    %cst_10 = arith.constant dense<0.000000e+00> : vector<1xf32>
    %17 = vector.multi_reduction <add>, %16, %cst_10 [1, 2, 3] : vector<1x1x16x16xf32> to vector<1xf32>
    %18 = vector.shape_cast %17 : vector<1xf32> to vector<1x1x1x1xf32>
    %19 = vector.extract %18[0, 0, 0, 0] : f32 from vector<1x1x1x1xf32>
    %20 = arith.mulf %6, %1 : vector<1x16x16xf32>
    %21 = vector.shape_cast %20 : vector<1x16x16xf32> to vector<1x1x16x16xf32>
    %cst_11 = arith.constant dense<0.000000e+00> : vector<1xf32>
    %22 = vector.multi_reduction <add>, %21, %cst_11 [1, 2, 3] : vector<1x1x16x16xf32> to vector<1xf32>
    %23 = vector.shape_cast %22 : vector<1xf32> to vector<1x1x1x1xf32>
    %24 = vector.extract %23[0, 0, 0, 0] : f32 from vector<1x1x1x1xf32>
    %25 = arith.mulf %5, %1 : vector<1x16x16xf32>
    %26 = vector.shape_cast %25 : vector<1x16x16xf32> to vector<1x1x16x16xf32>
    %cst_12 = arith.constant dense<0.000000e+00> : vector<1xf32>
    %27 = vector.multi_reduction <add>, %26, %cst_12 [1, 2, 3] : vector<1x1x16x16xf32> to vector<1xf32>
    %28 = vector.shape_cast %27 : vector<1xf32> to vector<1x1x1x1xf32>
    %29 = vector.extract %28[0, 0, 0, 0] : f32 from vector<1x1x1x1xf32>
    %30 = arith.mulf %11, %19 : f32
    %31 = arith.mulf %15, %15 : f32
    %32 = arith.subf %30, %31 : f32
    %cst_13 = arith.constant 0.000000e+00 : f32
    %33 = arith.cmpf ogt, %32, %cst_13 : f32
    %cst_14 = arith.constant 1.000000e+00 : f32
    %34 = arith.select %33, %32, %cst_14 : f32
    %35 = arith.mulf %19, %24 : f32
    %36 = arith.mulf %15, %29 : f32
    %37 = arith.subf %35, %36 : f32
    %38 = arith.divf %37, %34 : f32
    %cst_15 = arith.constant 0.000000e+00 : f32
    %39 = arith.select %33, %38, %cst_15 : f32
    %40 = arith.mulf %11, %29 : f32
    %41 = arith.mulf %15, %24 : f32
    %42 = arith.subf %40, %41 : f32
    %43 = arith.divf %42, %34 : f32
    %cst_16 = arith.constant 0.000000e+00 : f32
    %44 = arith.select %33, %43, %cst_16 : f32
    %45 = vector.broadcast %39 : f32 to vector<1x16x16xf32>
    %46 = arith.mulf %45, %0 : vector<1x16x16xf32>
    %47 = vector.broadcast %44 : f32 to vector<1x16x16xf32>
    %48 = arith.addf %46, %47 : vector<1x16x16xf32>
    %49 = arith.subf %48, %1 : vector<1x16x16xf32>
    %50 = math.absf %49 : vector<1x16x16xf32>
    %51 = arith.mulf %5, %50 : vector<1x16x16xf32>
    %52 = vector.shape_cast %51 : vector<1x16x16xf32> to vector<1x1x16x16xf32>
    %cst_17 = arith.constant dense<0.000000e+00> : vector<1xf32>
    %53 = vector.multi_reduction <add>, %52, %cst_17 [1, 2, 3] : vector<1x1x16x16xf32> to vector<1xf32>
    %54 = vector.shape_cast %53 : vector<1xf32> to vector<1x1x1x1xf32>
    %55 = vector.extract %54[0, 0, 0, 0] : f32 from vector<1x1x1x1xf32>
    %56 = tpu.iota {dimensions = array<i32: 1>} : vector<1x8xi32>
    %c0_i32 = arith.constant 0 : i32
    %57 = vector.broadcast %c0_i32 : i32 to vector<1x8xi32>
    %58 = arith.cmpi eq, %56, %57 : vector<1x8xi32>
    %c1_i32 = arith.constant 1 : i32
    %59 = vector.broadcast %c1_i32 : i32 to vector<1x8xi32>
    %60 = arith.cmpi eq, %56, %59 : vector<1x8xi32>
    %cst_18 = arith.constant 0.000000e+00 : f32
    %61 = vector.broadcast %19 : f32 to vector<1x8xf32>
    %62 = vector.broadcast %cst_18 : f32 to vector<1x8xf32>
    %63 = arith.select %60, %61, %62 : vector<1x8xi1>, vector<1x8xf32>
    %64 = vector.broadcast %55 : f32 to vector<1x8xf32>
    %65 = arith.select %58, %64, %63 : vector<1x8xi1>, vector<1x8xf32>
    %c0_19 = arith.constant 0 : index
    %c0_20 = arith.constant 0 : index
    %66 = vector.load %arg4[%c0_19, %c0_20] : memref<1x8xf32, #tpu.memory_space<vmem>>, vector<1x8xf32>
    tpu.vector_store %arg4[%c0_19, %c0_20], %65 {strides = array<i32>} : memref<1x8xf32, #tpu.memory_space<vmem>>, vector<1x8xf32>,
    return
  }
  func.func @transform_0(%arg0: i32) -> (i32, i32, i32) {
    %c0_i32 = arith.constant 0 : i32
    %c0_i32_0 = arith.constant 0 : i32
    %c0_i32_1 = arith.constant 0 : i32
    return %arg0, %c0_i32, %c0_i32_0 : i32, i32, i32
  }
  func.func @transform_1(%arg0: i32) -> (i32, i32, i32) {
    %c0_i32 = arith.constant 0 : i32
    %c0_i32_0 = arith.constant 0 : i32
    %c0_i32_1 = arith.constant 0 : i32
    return %arg0, %c0_i32, %c0_i32_0 : i32, i32, i32
  }
  func.func @transform_2(%arg0: i32) -> (i32, i32, i32) {
    %c0_i32 = arith.constant 0 : i32
    %c0_i32_0 = arith.constant 0 : i32
    %c0_i32_1 = arith.constant 0 : i32
    return %arg0, %c0_i32, %c0_i32_0 : i32, i32, i32
  }
  func.func @transform_3(%arg0: i32) -> (i32, i32) {
    %c0_i32 = arith.constant 0 : i32
    %c0_i32_0 = arith.constant 0 : i32
    return %arg0, %c0_i32 : i32, i32
  }
}

</mosaic_0001>

<llo_original>
// kernel: ssi_loss.1
$region0: #{ssi_loss.1}
  #allocation0 [shape = 'u32[]', space=smem, size = 0x4, offset = 0x4, fixed_abs, tag = 'smem constant byte address 0x4 - core index']
  #allocation1 [shape = 'u32[144,128]{1,0:T(1,128)}', space=vmem, size = 0x12000, scoped, tag = 'internal scratch']
  %s0 = inlined_call_operand.vmem [shape: f32[1,16,16], index: 0, kind: input, shape index: {}]
  %s1 = inlined_call_operand.hbm [shape: f32[1,16,16], index: 1, kind: input, shape index: {}]
  %s2 = inlined_call_operand.vmem [shape: s32[1,16,16], index: 2, kind: input, shape index: {}]
  %s3 = inlined_call_operand.vmem [shape: f32[1,8], index: 3, kind: output, shape index: {}]
  %s4 = sld [smem:[#allocation0]]
  $region26: #{ssi_loss.1} parent=0
    _
  %s6 = ssub.s32 1, %s4
  %s7 = scalar_select 0, %s6, %s4
  $region1: #{ssi_loss.1} parent=0
    #allocation2 [shape = 'u8[8192]{0}', space=vmem, size = 0x2000, scoped, tag = 'input window, operand 1, single buffered']
    #allocation3 [shape = 's32[1]{0}', space=sflag, size = 0x4, scoped, tag = 'scoped memory for ssi_loss.1']
    %8 = vsyncpa [#allocation3], 0
    // Predicated region
    $region2: #{ssi_loss.1} parent=1 // pred_check
      _
    $region3: #{ssi_loss.1} parent=1 // pred_check_branch
      %10 = sbr.rel (0) target = $region5
    $region4: #{ssi_loss.1} parent=1 // pred_region
      _
    $region5: #{ssi_loss.1} parent=1 // pred_fallthru
      _
    // Predicated region
    $region6: #{ssi_loss.1} parent=1 // pred_check
      _
    $region7: #{ssi_loss.1} parent=1 // pred_check_branch
      %12 = sbr.rel (0) target = $region9
    $region8: #{ssi_loss.1} parent=1 // pred_region
      %s14 = ssub.s32 256, 256
      %15 = vsyncadd [#allocation3], %s14
      %s16 = sshll.u32 [#allocation2], 4
      %s17 = int_to_ptr.vmem [resolvable:$true] %s16
      %22 = dma.hbm_to_vmem [thread:$0]  %s1, 256, %s17, [#allocation3], 128, 128, 8
    $region9: #{ssi_loss.1} parent=1 // pred_fallthru
      _
    // Predicated region
    $region10: #{ssi_loss.1} parent=1 // pred_check
      _
    $region11: #{ssi_loss.1} parent=1 // pred_check_branch
      %24 = sbr.rel (0) target = $region13
    $region12: #{ssi_loss.1} parent=1 // pred_region
      _
    $region13: #{ssi_loss.1} parent=1 // pred_fallthru
      _
    // Predicated region
    $region14: #{ssi_loss.1} parent=1 // pred_check
      _
    $region15: #{ssi_loss.1} parent=1 // pred_check_branch
      %26 = sbr.rel (0) target = $region17
    $region16: #{ssi_loss.1} parent=1 // pred_region
      %27 = dma.done [#allocation3], 256
    $region17: #{ssi_loss.1} parent=1 // pred_fallthru
      _
    %v28 = vld [vmem:[%s0] sm:$0xff]
    %v29 = vld [vmem:[%s0 + $0x8] sm:$0xff]
    %v30 = vld [vmem:[#allocation2] sm:$0xff]
    %v31 = vld [vmem:[#allocation2 + $0x8] sm:$0xff]
    %v32 = vld [vmem:[%s2] sm:$0xff]
    %v33 = vld [vmem:[%s2 + $0x8] sm:$0xff]
    %vm34 = vcmp.ne.s32.totalorder %v32, 0
    %vm35 = vcmp.ne.s32.totalorder %v33, 0
    %v36 = vsel %vm34, 1, 0
    %v37 = vsel %vm35, 1, 0
    %v38 = vcvt.s32.f32 %v36
    %v39 = vcvt.s32.f32 %v37
    %v40 = vmul.f32 %v38, %v28
    %v41 = vmul.f32 %v39, %v29
    %v42 = vmul.f32 %v40, %v28
    %v43 = vmul.f32 %v41, %v29
    %vm44 = vcmask 130048
    %v45 = vsel %vm44, %v42, 0.0
    %v46 = vsel %vm44, %v43, 0.0
    %v47 = vadd.f32 %v45, %v46
    %48 = vadd.xlane.f32.xlu0 %v47
    %v49 = vpop.xlane.xlu0 %48
    %v50 = vrot.slane %v49, 4
    %v51 = vadd.f32 %v49, %v50
    %v52 = vrot.slane %v51, 2
    %v53 = vadd.f32 %v51, %v52
    %v54 = vrot.slane %v53, 1
    %v55 = vadd.f32 %v53, %v54
    %s56 = vtos %v55
    %v57 = vsel %vm44, %v40, 0.0
    %v58 = vsel %vm44, %v41, 0.0
    %v59 = vadd.f32 %v57, %v58
    %60 = vadd.xlane.f32.xlu0 %v59
    %v61 = vpop.xlane.xlu0 %60
    %v62 = vrot.slane %v61, 4
    %v63 = vadd.f32 %v61, %v62
    %v64 = vrot.slane %v63, 2
    %v65 = vadd.f32 %v63, %v64
    %v66 = vrot.slane %v65, 1
    %v67 = vadd.f32 %v65, %v66
    %s68 = vtos %v67
    %v69 = vsel %vm44, %v38, 0.0
    %v70 = vsel %vm44, %v39, 0.0
    %v71 = vadd.f32 %v69, %v70
    %72 = vadd.xlane.f32.xlu0 %v71
    %v73 = vpop.xlane.xlu0 %72
    %v74 = vrot.slane %v73, 4
    %v75 = vadd.f32 %v73, %v74
    %v76 = vrot.slane %v75, 2
    %v77 = vadd.f32 %v75, %v76
    %v78 = vrot.slane %v77, 1
    %v79 = vadd.f32 %v77, %v78
    %s80 = vtos %v79
    %v81 = vmul.f32 %v40, %v30
    %v82 = vmul.f32 %v41, %v31
    %v83 = vsel %vm44, %v81, 0.0
    %v84 = vsel %vm44, %v82, 0.0
    %v85 = vadd.f32 %v83, %v84
    %86 = vadd.xlane.f32.xlu0 %v85
    %v87 = vpop.xlane.xlu0 %86
    %v88 = vrot.slane %v87, 4
    %v89 = vadd.f32 %v87, %v88
    %v90 = vrot.slane %v89, 2
    %v91 = vadd.f32 %v89, %v90
    %v92 = vrot.slane %v91, 1
    %v93 = vadd.f32 %v91, %v92
    %s94 = vtos %v93
    %v95 = vmul.f32 %v38, %v30
    %v96 = vmul.f32 %v39, %v31
    %v97 = vsel %vm44, %v95, 0.0
    %v98 = vsel %vm44, %v96, 0.0
    %v99 = vadd.f32 %v97, %v98
    %100 = vadd.xlane.f32.xlu0 %v99
    %v101 = vpop.xlane.xlu0 %100
    %v102 = vrot.slane %v101, 4
    %v103 = vadd.f32 %v101, %v102
    %v104 = vrot.slane %v103, 2
    %v105 = vadd.f32 %v103, %v104
    %v106 = vrot.slane %v105, 1
    %v107 = vadd.f32 %v105, %v106
    %s108 = vtos %v107
    %s109 = smul.f32 %s56, %s80
    %s110 = smul.f32 %s68, %s68
    %s111 = ssub.f32 %s109, %s110
    %p112 = scmp.gt.f32.partialorder %s111, 0.0
    %s113 = scalar_select %p112, %s111, 1.0
    %s114 = smul.f32 %s80, %s94
    %s115 = smul.f32 %s68, %s108
    %s116 = ssub.f32 %s114, %s115
    %v117 = vstv %s113
    %v118 = vrcp.pop %v117
    %s119 = vtos %v118
    %s120 = smul.f32 %s116, %s119
    %s121 = scalar_select %p112, %s120, 0.0
    %s122 = smul.f32 %s56, %s108
    %s123 = smul.f32 %s68, %s94
    %s124 = ssub.f32 %s122, %s123
    %v125 = vstv %s113
    %v126 = vrcp.pop %v125
    %s127 = vtos %v126
    %s128 = smul.f32 %s124, %s127
    %s129 = scalar_select %p112, %s128, 0.0
    %v130 = vstv %s121
    %v131 = vmul.f32 %v130, %v28
    %v132 = vmul.f32 %v130, %v29
    %v133 = vstv %s129
    %v134 = vadd.f32 %v131, %v133
    %v135 = vadd.f32 %v132, %v133
    %v136 = vsub.f32 %v134, %v30
    %v137 = vsub.f32 %v135, %v31
    %v138 = vand.u32 2147483647, %v136
    %v139 = vand.u32 2147483647, %v137
    %v140 = vmul.f32 %v38, %v138
    %v141 = vmul.f32 %v39, %v139
    %v142 = vsel %vm44, %v140, 0.0
    %v143 = vsel %vm44, %v141, 0.0
    %v144 = vadd.f32 %v142, %v143
    %145 = vadd.xlane.f32.xlu0 %v144
    %v146 = vpop.xlane.xlu0 %145
    %v147 = vrot.slane %v146, 4
    %v148 = vadd.f32 %v146, %v147
    %v149 = vrot.slane %v148, 2
    %v150 = vadd.f32 %v148, %v149
    %v151 = vrot.slane %v150, 1
    %v152 = vadd.f32 %v150, %v151
    %s153 = vtos %v152
    %v154 = vlaneseq
    %v155 = vand.u32 %v154, 127
    %vm156 = vcmp.eq.s32.totalorder %v155, 0
    %vm157 = vcmp.eq.s32.totalorder %v155, 1
    %v158 = vstv %s80
    %v159 = vsel %vm157, %v158, 0.0
    %v160 = vstv %s153
    %v161 = vsel %vm156, %v160, %v159
    %vm162 = vcmask 57344
    %163 = vst.msk [vmem:[%s3] sm:$0x1] %vm162, %v161
    // Predicated region
    $region18: #{ssi_loss.1} parent=1 // pred_check
      _
    $region19: #{ssi_loss.1} parent=1 // pred_check_branch
      %165 = sbr.rel (0) target = $region21
    $region20: #{ssi_loss.1} parent=1 // pred_region
      _
    $region21: #{ssi_loss.1} parent=1 // pred_fallthru
      _
    // Predicated region
    $region22: #{ssi_loss.1} parent=1 // pred_check
      _
    $region23: #{ssi_loss.1} parent=1 // pred_check_branch
      %167 = sbr.rel (0) target = $region25
    $region24: #{ssi_loss.1} parent=1 // pred_region
      _
    $region25: #{ssi_loss.1} parent=1 // pred_fallthru
      _
    %168 = vsyncpa [#allocation3], 1

</llo_original>
